<compile_context>
chip_gen: v7x
topology: tpu7x:2x2x1
jax: 0.10.0
libtpu: 0.0.40
codegen_flags: <defaults>
</compile_context>

<pallas_src>
import jax
import jax.numpy as jnp
from jax.experimental import pallas as pl
from jax.experimental.pallas import tpu as pltpu


def _round_up(x, m):
    return ((x + m - 1) // m) * m


# -----------------------------------------------------------------------------
# Stage 1: image projection  proj = img @ W_proj   (tiny, runs once, no grid)
# -----------------------------------------------------------------------------
def _proj_kernel(img_ref, wproj_ref, proj_ref):
    # img_ref:   (B_pad, F) bf16
    # wproj_ref: (F, E)     bf16
    # proj_ref:  (B_pad, E) bf16 (written once; f32 MXU accumulation)
    proj_ref[...] = jnp.dot(
        img_ref[...], wproj_ref[...],
        preferred_element_type=jnp.float32).astype(jnp.bfloat16)


def _project_image(img_bf16, wproj_bf16):
    B_pad, _ = img_bf16.shape
    _, E = wproj_bf16.shape
    return pl.pallas_call(
        _proj_kernel,
        out_shape=jax.ShapeDtypeStruct((B_pad, E), jnp.bfloat16),
    )(img_bf16, wproj_bf16)


# -----------------------------------------------------------------------------
# Stage 2: concept scores  score = proj @ High2Vec^T
#          (High2Vec pre-transposed to (E, H); lane-dense (E, tH) tiles streamed)
# -----------------------------------------------------------------------------
def _concept_score_kernel(proj_ref, h2vt_ref, score_ref):
    # proj_ref:  (B_pad, E)  bf16, resident across all H tiles
    # h2vt_ref:  (E, tH)     bf16 High2Vec^T tile, streamed / double-buffered
    # score_ref: (B_pad, tH) f32 concept-score tile (lane-dense output)
    #
    # MXU-native (M,K)x(K,N) orientation: no per-tile XLU transpose, no scratch,
    # no state carried across the H axis -> the grid axis can run "parallel".
    score_ref[...] = jnp.dot(
        proj_ref[...], h2vt_ref[...], preferred_element_type=jnp.float32)


def retriever_full_forward(img, w_proj, high2vec, *, tile_h=2048):
    """Pallas retriever: concept_score = (img @ W_proj) @ High2Vec^T."""
    B, F = img.shape
    Fw, E = w_proj.shape
    H, Eh = high2vec.shape
    assert F == Fw and E == Eh

    # bf16 streaming (the kernel is HBM-bandwidth bound), f32 MXU accumulation.
    img = img.astype(jnp.bfloat16)
    w_proj = w_proj.astype(jnp.bfloat16)

    # Pre-transpose the static table once outside the kernel: (E, H) column slabs
    # stream lane-dense and feed the MXU directly (no in-kernel transpose).
    high2vec_t = high2vec.astype(jnp.bfloat16).T   # (E, H)

    # Pad batch up to a full sublane group (>= 8 rows).
    B_pad = max(8, _round_up(B, 8))
    if B_pad != B:
        img = jnp.pad(img, ((0, B_pad - B), (0, 0)))

    # Lane-dense H tiling: tH multiple of 128, H padded to a tile multiple.
    # Large tiles amortize the ~0.35 us per-grid-step cost; for vocab-scale E,
    # halve tile_h on v7x (64 MiB VMEM) relative to v5e/v6e (128 MiB).
    tH = min(_round_up(tile_h, 128), _round_up(H, 128))
    H_pad = _round_up(H, tH)
    if H_pad != H:
        high2vec_t = jnp.pad(high2vec_t, ((0, 0), (0, H_pad - H)))

    # Stage 1: projection, computed once outside the H loop.
    proj = _project_image(img, w_proj)              # (B_pad, E) bf16, resident

    grid = (H_pad // tH,)

    # VMEM budget: double-buffered table tile + double-buffered output tile +
    # (double-buffered) resident projection, with headroom.
    vmem_bytes = 2 * (E * tH * 2) + 2 * (B_pad * tH * 4) + 2 * (B_pad * E * 2)
    vmem_limit = int(min(max(2 * vmem_bytes + (4 << 20), 32 << 20), 64 << 20))

    scores_pad = pl.pallas_call(
        _concept_score_kernel,
        out_shape=jax.ShapeDtypeStruct((B_pad, H_pad), jnp.float32),
        grid_spec=pltpu.PrefetchScalarGridSpec(
            num_scalar_prefetch=0,
            grid=grid,
            in_specs=[
                pl.BlockSpec((B_pad, E), lambda h: (0, 0)),   # proj: resident
                pl.BlockSpec((E, tH), lambda h: (0, h)),      # High2Vec^T: streamed
            ],
            out_specs=pl.BlockSpec((B_pad, tH), lambda h: (0, h)),
        ),
        # Stateless H axis -> shard H tiles across v7x's two TensorCores
        # (no effect on single-TC v5e/v6e).
        compiler_params=pltpu.CompilerParams(
            dimension_semantics=("parallel",),
            vmem_limit_bytes=vmem_limit),
    )(proj, high2vec_t)

    return scores_pad[:B, :H]


def pipeline_generate_forward(img, w_proj, high2vec, select_word_size, *, tile_h=2048):
    """Mirrors Pipeline.forward(mode='Generate...') up to the generator call:
       concept_score = retriever.full_forward(img)
       vocab         = concept_score.topk(select_word_size, -1)[1]
    """
    concept_score = retriever_full_forward(img, w_proj, high2vec, tile_h=tile_h)
    # TODO(synk): replace with a streaming in-kernel top-k for vocab-scale H.
    _, vocab = jax.lax.top_k(concept_score, select_word_size)
    return concept_score, vocab


if __name__ == "__main__":
    # Small synthetic shapes consistent with the module:
    #   B images, F image-feature dim, E = word_emb_size, H = high_num
    B, F, E, H = 2, 64, 32, 300
    select_word_size = 8
    tile_h = 128   # small tile so the demo exercises a multi-step H grid + H padding

    key = jax.random.PRNGKey(0)
    k_img, k_w, k_h2v = jax.random.split(key, 3)

    img = jax.random.normal(k_img, (B, F), dtype=jnp.float32)          # image features
    w_proj = jax.random.normal(k_w, (F, E), dtype=jnp.float32) * 0.05  # retriever projection
    high2vec = jax.random.normal(k_h2v, (H, E), dtype=jnp.float32)     # High2Vec table

    concept_score, vocab = pipeline_generate_forward(
        img, w_proj, high2vec, select_word_size, tile_h=tile_h)
    jax.block_until_ready((concept_score, vocab))

    # Cross-check against a plain-JAX reference that reproduces the kernel's
    # bf16 quantization points (inputs + intermediate projection).
    img_b = img.astype(jnp.bfloat16).astype(jnp.float32)
    w_b = w_proj.astype(jnp.bfloat16).astype(jnp.float32)
    h_b = high2vec.astype(jnp.bfloat16).astype(jnp.float32)
    proj_ref = (img_b @ w_b).astype(jnp.bfloat16).astype(jnp.float32)
    ref = proj_ref @ h_b.T

    assert concept_score.shape == (B, H)
    assert vocab.shape == (B, select_word_size)
    assert jnp.allclose(concept_score, ref, atol=5e-2, rtol=5e-2)

    print("KERNEL_OK")
</pallas_src>

<mosaic_0001>
module attributes {stable_mosaic.version = 11 : i64} {
  func.func @_proj_kernel(%arg0: memref<8x64xbf16, #tpu.memory_space<vmem>>, %arg1: memref<64x32xbf16, #tpu.memory_space<vmem>>, %arg2: memref<8x32xbf16, #tpu.memory_space<vmem>>) attributes {dimension_semantics = [], scalar_prefetch = 0 : i64, scratch_operands = 0 : i64, tpu.core_type = #tpu.core_type<tc>} {
    %c0 = arith.constant 0 : index
    %c0_0 = arith.constant 0 : index
    %0 = vector.load %arg0[%c0, %c0_0] : memref<8x64xbf16, #tpu.memory_space<vmem>>, vector<8x64xbf16>
    %c0_1 = arith.constant 0 : index
    %c0_2 = arith.constant 0 : index
    %1 = vector.load %arg1[%c0_1, %c0_2] : memref<64x32xbf16, #tpu.memory_space<vmem>>, vector<64x32xbf16>
    %cst = arith.constant dense<0.000000e+00> : vector<8x32xf32>
    %2 = tpu.matmul %0, %1, %cst {dimension_numbers = #tpu.dot_dimension_numbers<[1], [0], [0], [1], [0, 0, 1, 1], [], []>} : vector<8x64xbf16>, vector<64x32xbf16>, vector<8x32xf32> -> vector<8x32xf32>
    %3 = arith.truncf %2 : vector<8x32xf32> to vector<8x32xbf16>
    %c0_3 = arith.constant 0 : index
    %c0_4 = arith.constant 0 : index
    %4 = vector.load %arg2[%c0_3, %c0_4] : memref<8x32xbf16, #tpu.memory_space<vmem>>, vector<8x32xbf16>
    tpu.vector_store %arg2[%c0_3, %c0_4], %3 {strides = array<i32>} : memref<8x32xbf16, #tpu.memory_space<vmem>>, vector<8x32xbf16>,
    return
  }
}

</mosaic_0001>

<llo_original>
// kernel: tpu_custom_call.1
$region0: #{tpu_custom_call.1}
  #allocation0 [shape = 'u32[]', space=smem, size = 0x4, offset = 0x4, fixed_abs, tag = 'smem constant byte address 0x4 - core index']
  #allocation1 [shape = 'u32[144,128]{1,0:T(1,128)}', space=vmem, size = 0x12000, scoped, tag = 'internal scratch']
  %s0 = inlined_call_operand.vmem [shape: bf16[8,64], index: 0, kind: input, shape index: {}]
  %s1 = inlined_call_operand.vmem [shape: bf16[64,32], index: 1, kind: input, shape index: {}]
  %s2 = inlined_call_operand.hbm [shape: bf16[8,32], index: 2, kind: output, shape index: {}]
  %s3 = sld [smem:[#allocation0]]
  $region18: #{tpu_custom_call.1} parent=0
    _
  %s5 = ssub.s32 1, %s3
  %s6 = scalar_select 0, %s5, %s3
  $region1: #{tpu_custom_call.1} parent=0
    #allocation2 [shape = 'u8[2048]{0}', space=vmem, size = 0x800, scoped, tag = 'output window, operand 0, single buffered']
    #allocation3 [shape = 's32[1]{0}', space=sflag, size = 0x4, scoped, tag = 'scoped memory for tpu_custom_call.1']
    %7 = vsyncpa [#allocation3], 0
    // Predicated region
    $region2: #{tpu_custom_call.1} parent=1 // pred_check
      _
    $region3: #{tpu_custom_call.1} parent=1 // pred_check_branch
      %9 = sbr.rel (0) target = $region5
    $region4: #{tpu_custom_call.1} parent=1 // pred_region
      _
    $region5: #{tpu_custom_call.1} parent=1 // pred_fallthru
      _
    // Predicated region
    $region6: #{tpu_custom_call.1} parent=1 // pred_check
      _
    $region7: #{tpu_custom_call.1} parent=1 // pred_check_branch
      %11 = sbr.rel (0) target = $region9
    $region8: #{tpu_custom_call.1} parent=1 // pred_region
      _
    $region9: #{tpu_custom_call.1} parent=1 // pred_fallthru
      _
    %v13 = vld [vmem:[%s0] sm:$0xf]
    %v14 = vld [vmem:[%s1] sm:$0xf]
    %v15 = vld [vmem:[%s1 + $0x4] sm:$0xf]
    %v16 = vld [vmem:[%s1 + $0x8] sm:$0xf]
    %v17 = vld [vmem:[%s1 + $0xc] sm:$0xf]
    %v18 = vld [vmem:[%s1 + $0x10] sm:$0xf]
    %v19 = vld [vmem:[%s1 + $0x14] sm:$0xf]
    %v20 = vld [vmem:[%s1 + $0x18] sm:$0xf]
    %v21 = vld [vmem:[%s1 + $0x1c] sm:$0xf]
    %v30 = vunpack.c.l.b16 %v14
    %v31 = vunpack.c.l.b16 %v15
    %v32 = vunpack.c.l.b16 %v16
    %v33 = vunpack.c.l.b16 %v17
    %v34 = vunpack.c.l.b16 %v18
    %v35 = vunpack.c.l.b16 %v19
    %v36 = vunpack.c.l.b16 %v20
    %v37 = vunpack.c.l.b16 %v21
    %v38 = vpack.c.b16 %v31, %v30
    %v39 = vpack.c.b16 %v33, %v32
    %v40 = vpack.c.b16 %v35, %v34
    %v41 = vpack.c.b16 %v37, %v36
    %vm46 = vcmask 523264
    %v48 = vsel %vm46, %v13, 0
    %50 = vmatprep.subr.bf16.mxu0 0
    %51 = vmatpush1.bf16.msra.mxu0 %v38
    %52 = vmatprep.subr.bf16.mxu0 0
    %53 = vmatpush1.bf16.msra.mxu0 %v39
    %54 = vmatprep.subr.bf16.mxu0 0
    %55 = vmatpush1.bf16.msra.mxu0 %v40
    %56 = vmatprep.subr.bf16.mxu0 0
    %57 = vmatpush1.bf16.msra.mxu0 %v41
    %58 = vmatprep.subr.bf16.mxu0 0
    %59 = vmatpush1.bf16.msra.mxu0 0
    %60 = vmatprep.subr.bf16.mxu0 0
    %61 = vmatpush1.bf16.msra.mxu0 0
    %62 = vmatprep.subr.bf16.mxu0 0
    %63 = vmatpush1.bf16.msra.mxu0 0
    %64 = vmatprep.subr.bf16.mxu0 0
    %65 = vmatpush1.bf16.msra.mxu0 0
    %66 = vmatprep.subr.bf16.mxu0 0
    %67 = vmatpush1.bf16.msra.mxu0 0
    %68 = vmatprep.subr.bf16.mxu0 0
    %69 = vmatpush1.bf16.msra.mxu0 0
    %70 = vmatprep.subr.bf16.mxu0 0
    %71 = vmatpush1.bf16.msra.mxu0 0
    %72 = vmatprep.subr.bf16.mxu0 0
    %73 = vmatpush1.bf16.msra.mxu0 0
    %74 = vmatprep.subr.bf16.mxu0 0
    %75 = vmatpush1.bf16.msra.mxu0 0
    %76 = vmatprep.subr.bf16.mxu0 0
    %77 = vmatpush1.bf16.msra.mxu0 0
    %78 = vmatprep.subr.bf16.mxu0 0
    %79 = vmatpush1.bf16.msra.mxu0 0
    %80 = vmatprep.subr.bf16.mxu0 0
    %81 = vmatpush1.bf16.msra.mxu0 0
    %82 = vmatprep.mubr.bf16.mxu0 0
    %83 = vmatmul.mubr.bf16.gmra.mrb[0].mxu0 %v48
    %v84 = vpop.f32.mrb[0].mxu0
    %v85 = vadd.f32 0.0, %v84
    %v86 = vpop.f32.mrb[0].mxu0
    %v87 = vpop.f32.mrb[0].mxu0
    %v88 = vpop.f32.mrb[0].mxu0
    %89 = vdwg.mxu0
    %v90 = vpack.c.bf16 %v85, %v85
    %vm91 = vcmask 257024
    %92 = vst.msk [vmem:[#allocation2] sm:$0xf] %vm91, %v90
    // Predicated region
    $region10: #{tpu_custom_call.1} parent=1 // pred_check
      _
    $region11: #{tpu_custom_call.1} parent=1 // pred_check_branch
      %94 = sbr.rel (0) target = $region13
    $region12: #{tpu_custom_call.1} parent=1 // pred_region
      %s96 = ssub.s32 64, 64
      %97 = vsyncadd [#allocation3], %s96
      %s99 = sshll.u32 [#allocation2], 4
      %s100 = int_to_ptr.vmem [resolvable:$true] %s99
      %102 = dma.vmem_to_hbm [thread:$0]  %s100, 64, %s2, [#allocation3]
    $region13: #{tpu_custom_call.1} parent=1 // pred_fallthru
      _
    // Predicated region
    $region14: #{tpu_custom_call.1} parent=1 // pred_check
      _
    $region15: #{tpu_custom_call.1} parent=1 // pred_check_branch
      %104 = sbr.rel (0) target = $region17
    $region16: #{tpu_custom_call.1} parent=1 // pred_region
      %105 = dma.done [#allocation3], 64
    $region17: #{tpu_custom_call.1} parent=1 // pred_fallthru
      _
    %106 = vsyncpa [#allocation3], 1

</llo_original>
